<compile_context>
chip_gen: v7x
topology: tpu7x:2x2x1
jax: 0.10.0
libtpu: 0.0.40
codegen_flags: <defaults>
</compile_context>

<pallas_src>
import functools

import jax
import jax.numpy as jnp
from jax.experimental import pallas as pl
from jax.experimental.pallas import tpu as pltpu


def _mlp_kernel(x_ref, w1_ref, b1_ref, w2_ref, b2_ref, w3_ref, b3_ref, o_ref):
    # In-kernel f32 -> bf16 cast of the streamed activations (VPU; overlapped with MXU).
    x = x_ref[...].astype(jnp.bfloat16)

    # Layer 1: Linear (bf16 x bf16 -> f32 accumulate) + bias + ReLU (f32).
    h1 = jnp.dot(x, w1_ref[...], preferred_element_type=jnp.float32)
    h1 = jnp.maximum(h1 + b1_ref[...], 0.0)

    # Dropout(0.25) == identity at inference.

    # Layer 2: Linear + ReLU.
    h2 = jnp.dot(h1.astype(jnp.bfloat16), w2_ref[...], preferred_element_type=jnp.float32)
    h2 = jnp.maximum(h2 + b2_ref[...], 0.0)

    # Layer 3: Linear. w3 is lane-padded to 128 for a clean MXU pass; only the true
    # output_dim columns are bias-added and stored (narrow masked store, tiny HBM write).
    out = jnp.dot(h2.astype(jnp.bfloat16), w3_ref[...], preferred_element_type=jnp.float32)
    od = o_ref.shape[-1]
    o_ref[...] = (out[:, :od] + b3_ref[...]).astype(o_ref.dtype)


@functools.partial(jax.jit, static_argnames=("tile_b",))
def regression_model_forward(x, params, tile_b=128):
    """x: (B, input_dim) float32. params: bf16 weights / f32 biases (w3 lane-padded)."""
    w1, b1, w2, b2, w3p, b3 = (
        params["w1"], params["b1"], params["w2"], params["b2"],
        params["w3_pad"], params["b3"],
    )
    B, D_in = x.shape
    D_h = w1.shape[1]
    N_pad = w3p.shape[1]          # padded matmul width for layer 3 (128)
    D_out = b3.shape[1]           # true output_dim (static at trace time)

    # Keep the grid simple: require an exact batch tiling (pad B in the caller otherwise).
    assert B % tile_b == 0, f"B={B} must be a multiple of tile_b={tile_b}"
    grid = (B // tile_b,)

    # Advisory cost hint so XLA schedules surrounding ops to overlap with this kernel.
    flops = 2 * B * (D_in * D_h + D_h * D_h + D_h * N_pad)
    bytes_accessed = (
        x.size * 4                                   # f32 activations streamed in
        + (w1.size + w2.size + w3p.size) * 2         # bf16 weights
        + (b1.size + b2.size + b3.size) * 4          # f32 biases
        + B * D_out * 4                              # narrow f32 output
    )
    cost = pl.CostEstimate(flops=flops, transcendentals=0, bytes_accessed=bytes_accessed)

    out = pl.pallas_call(
        _mlp_kernel,
        out_shape=jax.ShapeDtypeStruct((B, D_out), jnp.float32),
        grid_spec=pltpu.PrefetchScalarGridSpec(
            num_scalar_prefetch=0,
            grid=grid,
            in_specs=[
                pl.BlockSpec((tile_b, D_in), lambda i: (i, 0)),   # x tile (f32, streamed)
                pl.BlockSpec((D_in, D_h), lambda i: (0, 0)),      # w1 (resident)
                pl.BlockSpec((1, D_h), lambda i: (0, 0)),         # b1
                pl.BlockSpec((D_h, D_h), lambda i: (0, 0)),       # w2
                pl.BlockSpec((1, D_h), lambda i: (0, 0)),         # b2
                pl.BlockSpec((D_h, N_pad), lambda i: (0, 0)),     # w3 (lane-padded)
                pl.BlockSpec((1, D_out), lambda i: (0, 0)),       # b3 (true width)
            ],
            # Narrow output block: last dim equals the full array dim, so this is legal;
            # writes only output_dim lanes/row instead of a 128-lane padded slab.
            out_specs=pl.BlockSpec((tile_b, D_out), lambda i: (i, 0)),
        ),
        compiler_params=pltpu.CompilerParams(
            dimension_semantics=("parallel",),   # batch axis shards across v7x's 2 TCs
            vmem_limit_bytes=32 * 1024 * 1024,   # headroom when tile_b/hidden_dim grow (v5e default is 16 MiB)
        ),
        cost_estimate=cost,
    )(x, w1, b1, w2, b2, w3p, b3)

    return out


def init_params(key, input_dim, hidden_dim, output_dim, pad_out=128):
    """Deterministic synthetic params (same shapes as the PyTorch module)."""
    k1, k2, k3, k4, k5, k6 = jax.random.split(key, 6)
    scale1 = 1.0 / jnp.sqrt(input_dim)
    scale2 = 1.0 / jnp.sqrt(hidden_dim)
    w1 = jax.random.uniform(k1, (input_dim, hidden_dim), jnp.float32, -scale1, scale1)
    b1 = jax.random.uniform(k2, (1, hidden_dim), jnp.float32, -scale1, scale1)
    w2 = jax.random.uniform(k3, (hidden_dim, hidden_dim), jnp.float32, -scale2, scale2)
    b2 = jax.random.uniform(k4, (1, hidden_dim), jnp.float32, -scale2, scale2)
    w3 = jax.random.uniform(k5, (hidden_dim, output_dim), jnp.float32, -scale2, scale2)
    b3 = jax.random.uniform(k6, (1, output_dim), jnp.float32, -scale2, scale2)

    # bf16 weights (f32 MXU accumulation in-kernel); biases stay f32.
    w1_bf, w2_bf, w3_bf = (w.astype(jnp.bfloat16) for w in (w1, w2, w3))

    # Pad the narrow head's weight to 128 lanes (zeros) for a clean MXU matmul; the kernel
    # only stores the first output_dim columns, so the output itself is NOT padded.
    w3_pad = jnp.zeros((hidden_dim, pad_out), jnp.bfloat16).at[:, :output_dim].set(w3_bf)

    return {
        "w1": w1_bf, "b1": b1, "w2": w2_bf, "b2": b2,
        "w3_pad": w3_pad, "b3": b3,
        # kept (unpadded) for the pure-JAX reference check only
        "w3": w3_bf,
    }


def reference_forward(x, params):
    """Pure-JAX reference mirroring the kernel's bf16-in / f32-accumulate precision."""
    bf16, f32 = jnp.bfloat16, jnp.float32
    xb = x.astype(bf16).astype(f32)
    h = jnp.maximum(xb @ params["w1"].astype(f32) + params["b1"], 0.0)
    h = h.astype(bf16).astype(f32)
    h = jnp.maximum(h @ params["w2"].astype(f32) + params["b2"], 0.0)   # dropout == identity
    h = h.astype(bf16).astype(f32)
    return h @ params["w3"].astype(f32) + params["b3"]


if __name__ == "__main__":
    # Small shapes consistent with the module (MLP regressor), sized so the grid has
    # 2 "parallel" steps (keeps both v7x TensorCores busy) and each matmul fills the MXU M dim.
    BATCH = 256
    INPUT_DIM = 256
    HIDDEN_DIM = 256
    OUTPUT_DIM = 1
    TILE_B = 128   # sweep 256/512/1024 for large B; 128 keeps grid=(2,) at this demo size

    key = jax.random.PRNGKey(0)
    kx, kp = jax.random.split(key)
    x = jax.random.normal(kx, (BATCH, INPUT_DIM), jnp.float32)
    params = init_params(kp, INPUT_DIM, HIDDEN_DIM, OUTPUT_DIM)

    out = regression_model_forward(x, params, tile_b=TILE_B)
    out = jax.block_until_ready(out)

    ref = reference_forward(x, params)
    assert out.shape == (BATCH, OUTPUT_DIM), out.shape
    assert jnp.allclose(out, ref, atol=2e-3, rtol=2e-3), "mismatch vs pure-JAX reference"

    print("KERNEL_OK")
</pallas_src>

<mosaic_0001>
module attributes {stable_mosaic.version = 11 : i64} {
  func.func @_mlp_kernel(%arg0: i32, %arg1: memref<128x256xf32, #tpu.memory_space<vmem>>, %arg2: memref<256x256xbf16, #tpu.memory_space<vmem>>, %arg3: memref<1x256xf32, #tpu.memory_space<vmem>>, %arg4: memref<256x256xbf16, #tpu.memory_space<vmem>>, %arg5: memref<1x256xf32, #tpu.memory_space<vmem>>, %arg6: memref<256x128xbf16, #tpu.memory_space<vmem>>, %arg7: memref<1x1xf32, #tpu.memory_space<vmem>>, %arg8: memref<128x1xf32, #tpu.memory_space<vmem>>) attributes {dimension_semantics = [#tpu.dimension_semantics<parallel>], iteration_bounds = array<i64: 2>, scalar_prefetch = 0 : i64, scratch_operands = 0 : i64, tpu.core_type = #tpu.core_type<tc>, window_params = [{transform_indices = @transform_0, window_bounds = array<i64: 128, 256>}, {pipeline_mode = #tpu.pipeline_mode<synchronous>, transform_indices = @transform_1, window_bounds = array<i64: 256, 256>}, {pipeline_mode = #tpu.pipeline_mode<synchronous>, transform_indices = @transform_2, window_bounds = array<i64: 1, 256>}, {pipeline_mode = #tpu.pipeline_mode<synchronous>, transform_indices = @transform_3, window_bounds = array<i64: 256, 256>}, {pipeline_mode = #tpu.pipeline_mode<synchronous>, transform_indices = @transform_4, window_bounds = array<i64: 1, 256>}, {pipeline_mode = #tpu.pipeline_mode<synchronous>, transform_indices = @transform_5, window_bounds = array<i64: 256, 128>}, {pipeline_mode = #tpu.pipeline_mode<synchronous>, transform_indices = @transform_6, window_bounds = array<i64: 1, 1>}, {transform_indices = @transform_7, window_bounds = array<i64: 128, 1>}]} {
    %c0 = arith.constant 0 : index
    %c0_0 = arith.constant 0 : index
    %0 = vector.load %arg1[%c0, %c0_0] : memref<128x256xf32, #tpu.memory_space<vmem>>, vector<128x256xf32>
    %1 = arith.truncf %0 : vector<128x256xf32> to vector<128x256xbf16>
    %c0_1 = arith.constant 0 : index
    %c0_2 = arith.constant 0 : index
    %2 = vector.load %arg2[%c0_1, %c0_2] : memref<256x256xbf16, #tpu.memory_space<vmem>>, vector<256x256xbf16>
    %cst = arith.constant dense<0.000000e+00> : vector<128x256xf32>
    %3 = tpu.matmul %1, %2, %cst {dimension_numbers = #tpu.dot_dimension_numbers<[1], [0], [0], [1], [0, 0, 1, 1], [], []>} : vector<128x256xbf16>, vector<256x256xbf16>, vector<128x256xf32> -> vector<128x256xf32>
    %c0_3 = arith.constant 0 : index
    %c0_4 = arith.constant 0 : index
    %4 = vector.load %arg3[%c0_3, %c0_4] : memref<1x256xf32, #tpu.memory_space<vmem>>, vector<1x256xf32>
    %5 = vector.broadcast %4 : vector<1x256xf32> to vector<128x256xf32>
    %6 = arith.addf %3, %5 : vector<128x256xf32>
    %cst_5 = arith.constant 0.000000e+00 : f32
    %7 = vector.broadcast %cst_5 : f32 to vector<128x256xf32>
    %8 = arith.maximumf %6, %7 : vector<128x256xf32>
    %9 = arith.truncf %8 : vector<128x256xf32> to vector<128x256xbf16>
    %c0_6 = arith.constant 0 : index
    %c0_7 = arith.constant 0 : index
    %10 = vector.load %arg4[%c0_6, %c0_7] : memref<256x256xbf16, #tpu.memory_space<vmem>>, vector<256x256xbf16>
    %cst_8 = arith.constant dense<0.000000e+00> : vector<128x256xf32>
    %11 = tpu.matmul %9, %10, %cst_8 {dimension_numbers = #tpu.dot_dimension_numbers<[1], [0], [0], [1], [0, 0, 1, 1], [], []>} : vector<128x256xbf16>, vector<256x256xbf16>, vector<128x256xf32> -> vector<128x256xf32>
    %c0_9 = arith.constant 0 : index
    %c0_10 = arith.constant 0 : index
    %12 = vector.load %arg5[%c0_9, %c0_10] : memref<1x256xf32, #tpu.memory_space<vmem>>, vector<1x256xf32>
    %13 = vector.broadcast %12 : vector<1x256xf32> to vector<128x256xf32>
    %14 = arith.addf %11, %13 : vector<128x256xf32>
    %cst_11 = arith.constant 0.000000e+00 : f32
    %15 = vector.broadcast %cst_11 : f32 to vector<128x256xf32>
    %16 = arith.maximumf %14, %15 : vector<128x256xf32>
    %17 = arith.truncf %16 : vector<128x256xf32> to vector<128x256xbf16>
    %c0_12 = arith.constant 0 : index
    %c0_13 = arith.constant 0 : index
    %18 = vector.load %arg6[%c0_12, %c0_13] : memref<256x128xbf16, #tpu.memory_space<vmem>>, vector<256x128xbf16>
    %cst_14 = arith.constant dense<0.000000e+00> : vector<128x128xf32>
    %19 = tpu.matmul %17, %18, %cst_14 {dimension_numbers = #tpu.dot_dimension_numbers<[1], [0], [0], [1], [0, 0, 1, 1], [], []>} : vector<128x256xbf16>, vector<256x128xbf16>, vector<128x128xf32> -> vector<128x128xf32>
    %20 = vector.extract_strided_slice %19 {offsets = [0, 0], sizes = [128, 1], strides = [1, 1]} : vector<128x128xf32> to vector<128x1xf32>
    %c0_15 = arith.constant 0 : index
    %c0_16 = arith.constant 0 : index
    %21 = vector.load %arg7[%c0_15, %c0_16] : memref<1x1xf32, #tpu.memory_space<vmem>>, vector<1x1xf32>
    %22 = vector.broadcast %21 : vector<1x1xf32> to vector<128x1xf32>
    %23 = arith.addf %20, %22 : vector<128x1xf32>
    %c0_17 = arith.constant 0 : index
    %c0_18 = arith.constant 0 : index
    %24 = vector.load %arg8[%c0_17, %c0_18] : memref<128x1xf32, #tpu.memory_space<vmem>>, vector<128x1xf32>
    tpu.vector_store %arg8[%c0_17, %c0_18], %23 {strides = array<i32>} : memref<128x1xf32, #tpu.memory_space<vmem>>, vector<128x1xf32>,
    return
  }
  func.func @transform_0(%arg0: i32) -> (i32, i32) {
    %c0_i32 = arith.constant 0 : i32
    %c0_i32_0 = arith.constant 0 : i32
    return %arg0, %c0_i32 : i32, i32
  }
  func.func @transform_1(%arg0: i32) -> (i32, i32) {
    %c0_i32 = arith.constant 0 : i32
    %c0_i32_0 = arith.constant 0 : i32
    %c0_i32_1 = arith.constant 0 : i32
    return %c0_i32, %c0_i32_0 : i32, i32
  }
  func.func @transform_2(%arg0: i32) -> (i32, i32) {
    %c0_i32 = arith.constant 0 : i32
    %c0_i32_0 = arith.constant 0 : i32
    %c0_i32_1 = arith.constant 0 : i32
    return %c0_i32, %c0_i32_0 : i32, i32
  }
  func.func @transform_3(%arg0: i32) -> (i32, i32) {
    %c0_i32 = arith.constant 0 : i32
    %c0_i32_0 = arith.constant 0 : i32
    %c0_i32_1 = arith.constant 0 : i32
    return %c0_i32, %c0_i32_0 : i32, i32
  }
  func.func @transform_4(%arg0: i32) -> (i32, i32) {
    %c0_i32 = arith.constant 0 : i32
    %c0_i32_0 = arith.constant 0 : i32
    %c0_i32_1 = arith.constant 0 : i32
    return %c0_i32, %c0_i32_0 : i32, i32
  }
  func.func @transform_5(%arg0: i32) -> (i32, i32) {
    %c0_i32 = arith.constant 0 : i32
    %c0_i32_0 = arith.constant 0 : i32
    %c0_i32_1 = arith.constant 0 : i32
    return %c0_i32, %c0_i32_0 : i32, i32
  }
  func.func @transform_6(%arg0: i32) -> (i32, i32) {
    %c0_i32 = arith.constant 0 : i32
    %c0_i32_0 = arith.constant 0 : i32
    %c0_i32_1 = arith.constant 0 : i32
    return %c0_i32, %c0_i32_0 : i32, i32
  }
  func.func @transform_7(%arg0: i32) -> (i32, i32) {
    %c0_i32 = arith.constant 0 : i32
    %c0_i32_0 = arith.constant 0 : i32
    return %arg0, %c0_i32 : i32, i32
  }
}

</mosaic_0001>

<llo_original>
// kernel: regression_model_forward.1
$region0: #{regression_model_forward.1}
  #allocation0 [shape = 'u32[]', space=smem, size = 0x4, offset = 0x4, fixed_abs, tag = 'smem constant byte address 0x4 - core index']
  #allocation1 [shape = 'u32[144,128]{1,0:T(1,128)}', space=vmem, size = 0x12000, scoped, tag = 'internal scratch']
  #allocation2 [shape = 'f32[1,1]{1,0:T(1,128)S(1)}', space=vmem, size = 0x200, scoped, tag = 'scoped memory for regression_model_forward.1']
  %s0 = inlined_call_operand.hbm [shape: f32[256,256], index: 0, kind: input, shape index: {}]
  %s1 = inlined_call_operand.hbm [shape: bf16[256,256], index: 1, kind: input, shape index: {}]
  %s2 = inlined_call_operand.vmem [shape: f32[1,256], index: 2, kind: input, shape index: {}]
  %s3 = inlined_call_operand.hbm [shape: bf16[256,256], index: 3, kind: input, shape index: {}]
  %s4 = inlined_call_operand.vmem [shape: f32[1,256], index: 4, kind: input, shape index: {}]
  %s5 = inlined_call_operand.hbm [shape: bf16[256,128], index: 5, kind: input, shape index: {}]
  %s6 = inlined_call_operand.<no memory space> [shape: f32[1,1], index: 6, kind: input, shape index: {}]
  %s7 = inlined_call_operand.vmem [shape: f32[256,1], index: 7, kind: output, shape index: {}]
  %s8 = sld [smem:[#allocation0]]
  $region77: #{regression_model_forward.1} parent=0
    _
  %s10 = ssub.s32 1, %s8
  %s11 = scalar_select 0, %s10, %s8
  %v12 = vstv %s6
  %13 = vst [vmem:[#allocation2] sm:$0x1] %v12
  $region1: #{regression_model_forward.1} parent=0
    #allocation3 [shape = 'u8[262144]{0}', space=vmem, size = 0x40000, scoped, tag = 'input window, operand 0']
    #allocation4 [shape = 's32[2]{0}', space=sflag, size = 0x8, scoped, tag = 'scoped memory for regression_model_forward.1']
    #allocation5 [shape = 'u8[131072]{0}', space=vmem, size = 0x20000, scoped, tag = 'input window, operand 1, single buffered']
    #allocation6 [shape = 's32[1]{0}', space=sflag, size = 0x4, scoped, tag = 'scoped memory for regression_model_forward.1']
    #allocation7 [shape = 'u8[131072]{0}', space=vmem, size = 0x20000, scoped, tag = 'input window, operand 3, single buffered']
    #allocation8 [shape = 'u8[65536]{0}', space=vmem, size = 0x10000, scoped, tag = 'input window, operand 5, single buffered']
    #allocation9 [shape = 's32[1]{0}', space=sflag, size = 0x4, scoped, tag = 'scoped memory for regression_model_forward.1']
    %14 = vsyncpa [#allocation4], 0
    %s15 = scalar_lea.sflag [#allocation4], 1
    %16 = vsyncpa %s15, 0
    %17 = vsyncpa [#allocation6], 0
    %18 = vsyncpa [#allocation9], 0
    loop: start=0, step=1, limit=4
    $region2: #{regression_model_forward.1} parent=1 // loop_pre_header
      _
    $region3: #{regression_model_forward.1} parent=1 // loop_header
      %s20 = sphi 0, %s24
      %p21 = scmp.ge.s32.totalorder %s20, 4
      %s30 = sphi 0, %s32
      %s33 = sphi 0, %s30
      %s34 = sphi 0, %s33
      %s50 = sphi 0, %s34
      %s54 = sphi 0, %s54
      %s56 = sphi 0, %s54
      %s57 = sphi 0, %s56
      %s71 = sphi 0, %s57
      %s75 = sphi 0, %s75
      %s77 = sphi 0, %s75
      %s78 = sphi 0, %s77
      %s92 = sphi 0, %s78
      %s96 = sphi 0, %s96
      %s98 = sphi 0, %s96
      %s99 = sphi 0, %s98
      %s113 = sphi 0, %s99
      %s117 = sphi 0, %s117
      %s119 = sphi 0, %s117
      %s120 = sphi 0, %s119
      %s134 = sphi 0, %s120
      %s138 = sphi 0, %s138
      %s140 = sphi 0, %s138
      %s141 = sphi 0, %s140
      %s155 = sphi 0, %s141
      %s159 = sphi 0, %s159
      %s161 = sphi 0, %s159
      %s162 = sphi 0, %s161
      %s176 = sphi 0, %s162
      %s182 = sphi 0, %s184
      %s185 = sphi 0, %s182
      %s186 = sphi 0, %s185
      %s202 = sphi 0, %s186
    $region4: #{regression_model_forward.1} parent=1 // loop_header_branch
      %23 = sbr.rel (%p21) target = $region8
    $region5: #{regression_model_forward.1} parent=1 // loop_body
      %s25 = ssub.s32 %s20, 1
      %s26 = ssub.s32 %s20, 2
      %s27 = sadd.s32 %s20, 1
      %s28 = ssub.s32 %s20, %s27
      %p29 = scmp.eq.s32.totalorder %s28, 0
      %s31 = sadd.s32 %s30, 1
      %s32 = scalar_select %p29, %s30, %s31
      %p35 = pneg %p29
      %p36 = scmp.eq.s32.totalorder %s20, 1
      %p37 = por %p35, %p36
      %p38 = scmp.ne.s32.totalorder %s30, %s33
      %p39 = scmp.eq.s32.totalorder %s20, 0
      %p40 = por %p38, %p39
      %p41 = scmp.ne.s32.totalorder %s30, %s33
      %p42 = scmp.eq.s32.totalorder %s25, 1
      %p43 = por %p41, %p42
      %p44 = scmp.ne.s32.totalorder %s33, %s34
      %p45 = scmp.eq.s32.totalorder %s25, 0
      %p46 = por %p44, %p45
      %p47 = scmp.ne.s32.totalorder %s33, %s34
      %p48 = scmp.eq.s32.totalorder %s26, 1
      %p49 = por %p47, %p48
      %p51 = scmp.ne.s32.totalorder %s34, %s50
      %p52 = scmp.eq.s32.totalorder %s26, 0
      %p53 = por %p51, %p52
      %s55 = sadd.s32 %s54, 1
      %p58 = scmp.eq.s32.totalorder %s20, 1
      %p59 = scmp.ne.s32.totalorder %s54, %s56
      %p60 = scmp.eq.s32.totalorder %s20, 0
      %p61 = por %p59, %p60
      %p62 = scmp.ne.s32.totalorder %s54, %s56
      %p63 = scmp.eq.s32.totalorder %s25, 1
      %p64 = por %p62, %p63
      %p65 = scmp.ne.s32.totalorder %s56, %s57
      %p66 = scmp.eq.s32.totalorder %s25, 0
      %p67 = por %p65, %p66
      %p68 = scmp.ne.s32.totalorder %s56, %s57
      %p69 = scmp.eq.s32.totalorder %s26, 1
      %p70 = por %p68, %p69
      %p72 = scmp.ne.s32.totalorder %s57, %s71
      %p73 = scmp.eq.s32.totalorder %s26, 0
      %p74 = por %p72, %p73
      %s76 = sadd.s32 %s75, 1
      %p79 = scmp.eq.s32.totalorder %s20, 1
      %p80 = scmp.ne.s32.totalorder %s75, %s77
      %p81 = scmp.eq.s32.totalorder %s20, 0
      %p82 = por %p80, %p81
      %p83 = scmp.ne.s32.totalorder %s75, %s77
      %p84 = scmp.eq.s32.totalorder %s25, 1
      %p85 = por %p83, %p84
      %p86 = scmp.ne.s32.totalorder %s77, %s78
      %p87 = scmp.eq.s32.totalorder %s25, 0
      %p88 = por %p86, %p87
      %p89 = scmp.ne.s32.totalorder %s77, %s78
      %p90 = scmp.eq.s32.totalorder %s26, 1
      %p91 = por %p89, %p90
      %p93 = scmp.ne.s32.totalorder %s78, %s92
      %p94 = scmp.eq.s32.totalorder %s26, 0
      %p95 = por %p93, %p94
      %s97 = sadd.s32 %s96, 1
      %p100 = scmp.eq.s32.totalorder %s20, 1
      %p101 = scmp.ne.s32.totalorder %s96, %s98
      %p102 = scmp.eq.s32.totalorder %s20, 0
      %p103 = por %p101, %p102
      %p104 = scmp.ne.s32.totalorder %s96, %s98
      %p105 = scmp.eq.s32.totalorder %s25, 1
      %p106 = por %p104, %p105
      %p107 = scmp.ne.s32.totalorder %s98, %s99
      %p108 = scmp.eq.s32.totalorder %s25, 0
      %p109 = por %p107, %p108
      %p110 = scmp.ne.s32.totalorder %s98, %s99
      %p111 = scmp.eq.s32.totalorder %s26, 1
      %p112 = por %p110, %p111
      %p114 = scmp.ne.s32.totalorder %s99, %s113
      %p115 = scmp.eq.s32.totalorder %s26, 0
      %p116 = por %p114, %p115
      %s118 = sadd.s32 %s117, 1
      %p121 = scmp.eq.s32.totalorder %s20, 1
      %p122 = scmp.ne.s32.totalorder %s117, %s119
      %p123 = scmp.eq.s32.totalorder %s20, 0
      %p124 = por %p122, %p123
      %p125 = scmp.ne.s32.totalorder %s117, %s119
      %p126 = scmp.eq.s32.totalorder %s25, 1
      %p127 = por %p125, %p126
      %p128 = scmp.ne.s32.totalorder %s119, %s120
      %p129 = scmp.eq.s32.totalorder %s25, 0
      %p130 = por %p128, %p129
      %p131 = scmp.ne.s32.totalorder %s119, %s120
      %p132 = scmp.eq.s32.totalorder %s26, 1
      %p133 = por %p131, %p132
      %p135 = scmp.ne.s32.totalorder %s120, %s134
      %p136 = scmp.eq.s32.totalorder %s26, 0
      %p137 = por %p135, %p136
      %s139 = sadd.s32 %s138, 1
      %p142 = scmp.eq.s32.totalorder %s20, 1
      %p143 = scmp.ne.s32.totalorder %s138, %s140
      %p144 = scmp.eq.s32.totalorder %s20, 0
      %p145 = por %p143, %p144
      %p146 = scmp.ne.s32.totalorder %s138, %s140
      %p147 = scmp.eq.s32.totalorder %s25, 1
      %p148 = por %p146, %p147
      %p149 = scmp.ne.s32.totalorder %s140, %s141
      %p150 = scmp.eq.s32.totalorder %s25, 0
      %p151 = por %p149, %p150
      %p152 = scmp.ne.s32.totalorder %s140, %s141
      %p153 = scmp.eq.s32.totalorder %s26, 1
      %p154 = por %p152, %p153
      %p156 = scmp.ne.s32.totalorder %s141, %s155
      %p157 = scmp.eq.s32.totalorder %s26, 0
      %p158 = por %p156, %p157
      %s160 = sadd.s32 %s159, 1
      %p163 = scmp.eq.s32.totalorder %s20, 1
      %p164 = scmp.ne.s32.totalorder %s159, %s161
      %p165 = scmp.eq.s32.totalorder %s20, 0
      %p166 = por %p164, %p165
      %p167 = scmp.ne.s32.totalorder %s159, %s161
      %p168 = scmp.eq.s32.totalorder %s25, 1
      %p169 = por %p167, %p168
      %p170 = scmp.ne.s32.totalorder %s161, %s162
      %p171 = scmp.eq.s32.totalorder %s25, 0
      %p172 = por %p170, %p171
      %p173 = scmp.ne.s32.totalorder %s161, %s162
      %p174 = scmp.eq.s32.totalorder %s26, 1
      %p175 = por %p173, %p174
      %p177 = scmp.ne.s32.totalorder %s162, %s176
      %p178 = scmp.eq.s32.totalorder %s26, 0
      %p179 = por %p177, %p178
      %s180 = ssub.s32 %s20, %s27
      %p181 = scmp.eq.s32.totalorder %s180, 0
      %s183 = sadd.s32 %s182, 1
      %s184 = scalar_select %p181, %s182, %s183
      %p187 = pneg %p181
      %p188 = scmp.eq.s32.totalorder %s20, 1
      %p189 = por %p187, %p188
      %p190 = scmp.ne.s32.totalorder %s182, %s185
      %p191 = scmp.eq.s32.totalorder %s20, 0
      %p192 = por %p190, %p191
      %p193 = scmp.ne.s32.totalorder %s182, %s185
      %p194 = scmp.eq.s32.totalorder %s25, 1
      %p195 = por %p193, %p194
      %p196 = scmp.ne.s32.totalorder %s185, %s186
      %p197 = scmp.eq.s32.totalorder %s25, 0
      %p198 = por %p196, %p197
      %p199 = scmp.ne.s32.totalorder %s185, %s186
      %p200 = scmp.eq.s32.totalorder %s26, 1
      %p201 = por %p199, %p200
      %p203 = scmp.ne.s32.totalorder %s186, %s202
      %p204 = scmp.eq.s32.totalorder %s26, 0
      %p205 = por %p203, %p204
      %p206 = scmp.le.s32.totalorder 1, %s20
      %p207 = scmp.lt.s32.totalorder %s20, 3
      %p208 = pnand %p206, %p207
      %p209 = pneg %p208
      // Predicated region
      $region9: #{regression_model_forward.1} parent=5 // pred_check
        _
      $region10: #{regression_model_forward.1} parent=5 // pred_check_branch
        %211 = sbr.rel (%p208) target = $region12
      $region11: #{regression_model_forward.1} parent=5 // pred_region
        %s212 = ssub.s32 %s20, 1
        // Predicated region
        $region13: #{regression_model_forward.1} parent=11 // pred_check
          %p213 = pneg %p67
        $region14: #{regression_model_forward.1} parent=11 // pred_check_branch
          %215 = sbr.rel (%p213) target = $region16
        $region15: #{regression_model_forward.1} parent=11 // pred_region
          %s217 = ssub.s32 4096, 4096
          %218 = vsyncadd [#allocation6], %s217
          %s219 = sshll.u32 [#allocation5], 4
          %s220 = int_to_ptr.vmem [resolvable:$true] %s219
          %225 = dma.hbm_to_vmem [thread:$0]  %s1, 4096, %s220, [#allocation6], 128, 128, 8
        $region16: #{regression_model_forward.1} parent=11 // pred_fallthru
          _
        // Predicated region
        $region17: #{regression_model_forward.1} parent=11 // pred_check
          %p226 = pneg %p88
        $region18: #{regression_model_forward.1} parent=11 // pred_check_branch
          %228 = sbr.rel (%p226) target = $region20
        $region19: #{regression_model_forward.1} parent=11 // pred_region
          _
        $region20: #{regression_model_forward.1} parent=11 // pred_fallthru
          _
        // Predicated region
        $region21: #{regression_model_forward.1} parent=11 // pred_check
          %p229 = pneg %p109
        $region22: #{regression_model_forward.1} parent=11 // pred_check_branch
          %231 = sbr.rel (%p229) target = $region24
        $region23: #{regression_model_forward.1} parent=11 // pred_region
          %s233 = ssub.s32 4096, 4096
          %234 = vsyncadd [#allocation6], %s233
          %s235 = sshll.u32 [#allocation7], 4
          %s236 = int_to_ptr.vmem [resolvable:$true] %s235
          %241 = dma.hbm_to_vmem [thread:$0]  %s3, 4096, %s236, [#allocation6], 128, 128, 8
        $region24: #{regression_model_forward.1} parent=11 // pred_fallthru
          _
        // Predicated region
        $region25: #{regression_model_forward.1} parent=11 // pred_check
          %p242 = pneg %p130
        $region26: #{regression_model_forward.1} parent=11 // pred_check_branch
          %244 = sbr.rel (%p242) target = $region28
        $region27: #{regression_model_forward.1} parent=11 // pred_region
          _
        $region28: #{regression_model_forward.1} parent=11 // pred_fallthru
          _
        // Predicated region
        $region29: #{regression_model_forward.1} parent=11 // pred_check
          %p245 = pneg %p151
        $region30: #{regression_model_forward.1} parent=11 // pred_check_branch
          %247 = sbr.rel (%p245) target = $region32
        $region31: #{regression_model_forward.1} parent=11 // pred_region
          %s249 = ssub.s32 2048, 2048
          %250 = vsyncadd [#allocation9], %s249
          %s251 = sshll.u32 [#allocation8], 4
          %s252 = int_to_ptr.vmem [resolvable:$true] %s251
          %257 = dma.hbm_to_vmem [thread:$0]  %s5, 2048, %s252, [#allocation9], 64, 64, 4
        $region32: #{regression_model_forward.1} parent=11 // pred_fallthru
          _
        // Predicated region
        $region33: #{regression_model_forward.1} parent=11 // pred_check
          %p258 = pneg %p172
        $region34: #{regression_model_forward.1} parent=11 // pred_check_branch
          %260 = sbr.rel (%p258) target = $region36
        $region35: #{regression_model_forward.1} parent=11 // pred_region
          _
        $region36: #{regression_model_forward.1} parent=11 // pred_fallthru
          _
      $region12: #{regression_model_forward.1} parent=5 // pred_fallthru
        _
      %p261 = scmp.lt.s32.totalorder %s20, 2
      // Predicated region
      $region37: #{regression_model_forward.1} parent=5 // pred_check
        %p262 = pneg %p261
      $region38: #{regression_model_forward.1} parent=5 // pred_check_branch
        %264 = sbr.rel (%p262) target = $region40
      $region39: #{regression_model_forward.1} parent=5 // pred_region
        // Predicated region
        $region41: #{regression_model_forward.1} parent=39 // pred_check
          %p265 = pneg %p40
        $region42: #{regression_model_forward.1} parent=39 // pred_check_branch
          %267 = sbr.rel (%p265) target = $region44
        $region43: #{regression_model_forward.1} parent=39 // pred_region
          %s268 = sand.u32 %s30, 1
          %s269 = scalar_lea.sflag [#allocation4], %s268
          %s270 = sand.u32 %s30, 1
          %s271 = smul.addr %s270, 256
          %s272 = scalar_lea.vmem [#allocation3], %s271
          %s273 = smul.u32 16, %s20
          %s275 = ssub.s32 4096, 4096
          %276 = vsyncadd %s269, %s275
          %s277 = smul.addr %s273, 2
          %s278 = smul.addr %s277, 128
          %s279 = scalar_lea.hbm %s0, %s278
          %s280 = sshll.u32 %s272, 4
          %s281 = int_to_ptr.vmem [resolvable:$true] %s280
          %286 = dma.hbm_to_vmem [thread:$0]  %s279, 4096, %s281, %s269, 256, 256, 16
        $region44: #{regression_model_forward.1} parent=39 // pred_fallthru
          _
      $region40: #{regression_model_forward.1} parent=5 // pred_fallthru
        _
      %p287 = scmp.le.s32.totalorder 1, %s20
      %p288 = scmp.lt.s32.totalorder %s20, 3
      %p289 = pnand %p287, %p288
      %p290 = pneg %p289
      // Predicated region
      $region45: #{regression_model_forward.1} parent=5 // pred_check
        _
      $region46: #{regression_model_forward.1} parent=5 // pred_check_branch
        %292 = sbr.rel (%p289) target = $region48
      $region47: #{regression_model_forward.1} parent=5 // pred_region
        %s293 = ssub.s32 %s20, 1
        %s294 = sand.u32 %s33, 1
        %s295 = scalar_lea.sflag [#allocation4], %s294
        %s296 = sand.u32 %s33, 1
        %s297 = smul.addr %s296, 256
        %s298 = scalar_lea.vmem [#allocation3], %s297
        // Predicated region
        $region49: #{regression_model_forward.1} parent=47 // pred_check
          %p299 = pneg %p46
        $region50: #{regression_model_forward.1} parent=47 // pred_check_branch
          %301 = sbr.rel (%p299) target = $region52
        $region51: #{regression_model_forward.1} parent=47 // pred_region
          %302 = dma.done %s295, 4096
        $region52: #{regression_model_forward.1} parent=47 // pred_fallthru
          _
        // Predicated region
        $region53: #{regression_model_forward.1} parent=47 // pred_check
          %p303 = pneg %p67
        $region54: #{regression_model_forward.1} parent=47 // pred_check_branch
          %305 = sbr.rel (%p303) target = $region56
        $region55: #{regression_model_forward.1} parent=47 // pred_region
          %306 = dma.done [#allocation6], 4096
        $region56: #{regression_model_forward.1} parent=47 // pred_fallthru
          _
        // Predicated region
        $region57: #{regression_model_forward.1} parent=47 // pred_check
          %p307 = pneg %p109
        $region58: #{regression_model_forward.1} parent=47 // pred_check_branch
          %309 = sbr.rel (%p307) target = $region60
        $region59: #{regression_model_forward.1} parent=47 // pred_region
          %310 = dma.done [#allocation6], 4096
        $region60: #{regression_model_forward.1} parent=47 // pred_fallthru
          _
        // Predicated region
        $region61: #{regression_model_forward.1} parent=47 // pred_check
          %p311 = pneg %p151
        $region62: #{regression_model_forward.1} parent=47 // pred_check_branch
          %313 = sbr.rel (%p311) target = $region64
        $region63: #{regression_model_forward.1} parent=47 // pred_region
          %314 = dma.done [#allocation9], 2048
        $region64: #{regression_model_forward.1} parent=47 // pred_fallthru
          _
        %s315 = sand.u32 %s33, 1
        %s316 = scalar_lea.sflag [#allocation4], %s315
        %s317 = sand.u32 %s33, 1
        %s318 = smul.addr %s317, 256
        %s319 = scalar_lea.vmem [#allocation3], %s318
        %p320 = pneg %p46
        %p321 = pneg %p43
        %p322 = pneg %p67
        %p323 = pneg %p64
        %p324 = pneg %p88
        %p325 = pneg %p85
        %p326 = pneg %p109
        %p327 = pneg %p106
        %p328 = pneg %p130
        %p329 = pneg %p127
        %p330 = pneg %p151
        %p331 = pneg %p148
        %p332 = pneg %p172
        %p333 = pneg %p169
        %p334 = pneg %p198
        %p335 = pneg %p195
        %s336 = smul.u32 16, %s25
        %p337 = scmp.lt.s32.totalorder %s336, 31
        %s338 = scalar_select %p337, %s336, 31
        %s339 = smul.addr %s338, 8
        %s340 = scalar_lea.vmem %s7, %s339
        %s341 = smul.u32 16, %s25
        %s342 = smul.u32 16, %s25
        %p343 = scmp.lt.s32.totalorder %s342, 31
        %s344 = scalar_select %p343, %s342, 31
        %s345 = smul.addr %s344, 8
        %s346 = scalar_lea.vmem %s7, %s345
        %s347 = smul.u32 16, %s25
        %v349 = vld [vmem:[%s298] sm:$0xff]
        %v350 = vld [vmem:[%s298 + $0x8] sm:$0xff]
        %v351 = vld [vmem:[%s298 + $0x10] sm:$0xff]
        %v352 = vld [vmem:[%s298 + $0x18] sm:$0xff]
        %v353 = vld [vmem:[%s298 + $0x20] sm:$0xff]
        %v354 = vld [vmem:[%s298 + $0x28] sm:$0xff]
        %v355 = vld [vmem:[%s298 + $0x30] sm:$0xff]
        %v356 = vld [vmem:[%s298 + $0x38] sm:$0xff]
        %v357 = vld [vmem:[%s298 + $0x40] sm:$0xff]
        %v358 = vld [vmem:[%s298 + $0x48] sm:$0xff]
        %v359 = vld [vmem:[%s298 + $0x50] sm:$0xff]
        %v360 = vld [vmem:[%s298 + $0x58] sm:$0xff]
        %v361 = vld [vmem:[%s298 + $0x60] sm:$0xff]
        %v362 = vld [vmem:[%s298 + $0x68] sm:$0xff]
        %v363 = vld [vmem:[%s298 + $0x70] sm:$0xff]
        %v364 = vld [vmem:[%s298 + $0x78] sm:$0xff]
        %v365 = vld [vmem:[%s298 + $0x80] sm:$0xff]
        %v366 = vld [vmem:[%s298 + $0x88] sm:$0xff]
        %v367 = vld [vmem:[%s298 + $0x90] sm:$0xff]
        %v368 = vld [vmem:[%s298 + $0x98] sm:$0xff]
        %v369 = vld [vmem:[%s298 + $0xa0] sm:$0xff]
        %v370 = vld [vmem:[%s298 + $0xa8] sm:$0xff]
        %v371 = vld [vmem:[%s298 + $0xb0] sm:$0xff]
        %v372 = vld [vmem:[%s298 + $0xb8] sm:$0xff]
        %v373 = vld [vmem:[%s298 + $0xc0] sm:$0xff]
        %v374 = vld [vmem:[%s298 + $0xc8] sm:$0xff]
        %v375 = vld [vmem:[%s298 + $0xd0] sm:$0xff]
        %v376 = vld [vmem:[%s298 + $0xd8] sm:$0xff]
        %v377 = vld [vmem:[%s298 + $0xe0] sm:$0xff]
        %v378 = vld [vmem:[%s298 + $0xe8] sm:$0xff]
        %v379 = vld [vmem:[%s298 + $0xf0] sm:$0xff]
        %v380 = vld [vmem:[%s298 + $0xf8] sm:$0xff]
        %v381 = vpack.c.bf16 %v351, %v349
        %v382 = vpack.c.bf16 %v352, %v350
        %v383 = vpack.c.bf16 %v355, %v353
        %v384 = vpack.c.bf16 %v356, %v354
        %v385 = vpack.c.bf16 %v359, %v357
        %v386 = vpack.c.bf16 %v360, %v358
        %v387 = vpack.c.bf16 %v363, %v361
        %v388 = vpack.c.bf16 %v364, %v362
        %v389 = vpack.c.bf16 %v367, %v365
        %v390 = vpack.c.bf16 %v368, %v366
        %v391 = vpack.c.bf16 %v371, %v369
        %v392 = vpack.c.bf16 %v372, %v370
        %v393 = vpack.c.bf16 %v375, %v373
        %v394 = vpack.c.bf16 %v376, %v374
        %v395 = vpack.c.bf16 %v379, %v377
        %v396 = vpack.c.bf16 %v380, %v378
        %v397 = vld [vmem:[#allocation5] sm:$0xff]
        %v398 = vld [vmem:[#allocation5 + $0x8] sm:$0xff]
        %v399 = vld [vmem:[#allocation5 + $0x10] sm:$0xff]
        %v400 = vld [vmem:[#allocation5 + $0x18] sm:$0xff]
        %v401 = vld [vmem:[#allocation5 + $0x20] sm:$0xff]
        %v402 = vld [vmem:[#allocation5 + $0x28] sm:$0xff]
        %v403 = vld [vmem:[#allocation5 + $0x30] sm:$0xff]
        %v404 = vld [vmem:[#allocation5 + $0x38] sm:$0xff]
        %v405 = vld [vmem:[#allocation5 + $0x40] sm:$0xff]
        %v406 = vld [vmem:[#allocation5 + $0x48] sm:$0xff]
        %v407 = vld [vmem:[#allocation5 + $0x50] sm:$0xff]
        %v408 = vld [vmem:[#allocation5 + $0x58] sm:$0xff]
        %v409 = vld [vmem:[#allocation5 + $0x60] sm:$0xff]
        %v410 = vld [vmem:[#allocation5 + $0x68] sm:$0xff]
        %v411 = vld [vmem:[#allocation5 + $0x70] sm:$0xff]
        %v412 = vld [vmem:[#allocation5 + $0x78] sm:$0xff]
        %v413 = vld [vmem:[#allocation5 + $0x80] sm:$0xff]
        %v414 = vld [vmem:[#allocation5 + $0x88] sm:$0xff]
        %v415 = vld [vmem:[#allocation5 + $0x90] sm:$0xff]
        %v416 = vld [vmem:[#allocation5 + $0x98] sm:$0xff]
        %v417 = vld [vmem:[#allocation5 + $0xa0] sm:$0xff]
        %v418 = vld [vmem:[#allocation5 + $0xa8] sm:$0xff]
        %v419 = vld [vmem:[#allocation5 + $0xb0] sm:$0xff]
        %v420 = vld [vmem:[#allocation5 + $0xb8] sm:$0xff]
        %v421 = vld [vmem:[#allocation5 + $0xc0] sm:$0xff]
        %v422 = vld [vmem:[#allocation5 + $0xc8] sm:$0xff]
        %v423 = vld [vmem:[#allocation5 + $0xd0] sm:$0xff]
        %v424 = vld [vmem:[#allocation5 + $0xd8] sm:$0xff]
        %v425 = vld [vmem:[#allocation5 + $0xe0] sm:$0xff]
        %v426 = vld [vmem:[#allocation5 + $0xe8] sm:$0xff]
        %v427 = vld [vmem:[#allocation5 + $0xf0] sm:$0xff]
        %v428 = vld [vmem:[#allocation5 + $0xf8] sm:$0xff]
        %v429 = vld [vmem:[%s2] sm:$0x3]
        %v431 = vlaneseq
        %v432 = vshrl.u32 %v431, 7
        %v433 = vsub.s32 0, %v432
        %v434 = vrot.slane %v429, %v433
        %v435 = vlaneseq
        %v436 = vshrl.u32 %v435, 7
        %v437 = vsub.s32 1, %v436
        %v438 = vrot.slane %v429, %v437
        %v473 = vunpack.c.l.b16 %v397
        %v474 = vunpack.c.h.b16 %v397
        %v475 = vunpack.c.l.b16 %v398
        %v476 = vunpack.c.h.b16 %v398
        %v477 = vunpack.c.l.b16 %v399
        %v478 = vunpack.c.h.b16 %v399
        %v479 = vunpack.c.l.b16 %v400
        %v480 = vunpack.c.h.b16 %v400
        %v481 = vunpack.c.l.b16 %v401
        %v482 = vunpack.c.h.b16 %v401
        %v483 = vunpack.c.l.b16 %v402
        %v484 = vunpack.c.h.b16 %v402
        %v485 = vunpack.c.l.b16 %v403
        %v486 = vunpack.c.h.b16 %v403
        %v487 = vunpack.c.l.b16 %v404
        %v488 = vunpack.c.h.b16 %v404
        %v489 = vunpack.c.l.b16 %v405
        %v490 = vunpack.c.h.b16 %v405
        %v491 = vunpack.c.l.b16 %v406
        %v492 = vunpack.c.h.b16 %v406
        %v493 = vunpack.c.l.b16 %v407
        %v494 = vunpack.c.h.b16 %v407
        %v495 = vunpack.c.l.b16 %v408
        %v496 = vunpack.c.h.b16 %v408
        %v497 = vunpack.c.l.b16 %v409
        %v498 = vunpack.c.h.b16 %v409
        %v499 = vunpack.c.l.b16 %v410
        %v500 = vunpack.c.h.b16 %v410
        %v501 = vunpack.c.l.b16 %v411
        %v502 = vunpack.c.h.b16 %v411
        %v503 = vunpack.c.l.b16 %v412
        %v504 = vunpack.c.h.b16 %v412
        %v505 = vunpack.c.l.b16 %v413
        %v506 = vunpack.c.h.b16 %v413
        %v507 = vunpack.c.l.b16 %v414
        %v508 = vunpack.c.h.b16 %v414
        %v509 = vunpack.c.l.b16 %v415
        %v510 = vunpack.c.h.b16 %v415
        %v511 = vunpack.c.l.b16 %v416
        %v512 = vunpack.c.h.b16 %v416
        %v513 = vunpack.c.l.b16 %v417
        %v514 = vunpack.c.h.b16 %v417
        %v515 = vunpack.c.l.b16 %v418
        %v516 = vunpack.c.h.b16 %v418
        %v517 = vunpack.c.l.b16 %v419
        %v518 = vunpack.c.h.b16 %v419
        %v519 = vunpack.c.l.b16 %v420
        %v520 = vunpack.c.h.b16 %v420
        %v521 = vunpack.c.l.b16 %v421
        %v522 = vunpack.c.h.b16 %v421
        %v523 = vunpack.c.l.b16 %v422
        %v524 = vunpack.c.h.b16 %v422
        %v525 = vunpack.c.l.b16 %v423
        %v526 = vunpack.c.h.b16 %v423
        %v527 = vunpack.c.l.b16 %v424
        %v528 = vunpack.c.h.b16 %v424
        %v529 = vunpack.c.l.b16 %v425
        %v530 = vunpack.c.h.b16 %v425
        %v531 = vunpack.c.l.b16 %v426
        %v532 = vunpack.c.h.b16 %v426
        %v533 = vunpack.c.l.b16 %v427
        %v534 = vunpack.c.h.b16 %v427
        %v535 = vunpack.c.l.b16 %v428
        %v536 = vunpack.c.h.b16 %v428
        %v537 = vpack.c.b16 %v475, %v473
        %v538 = vpack.c.b16 %v476, %v474
        %v539 = vpack.c.b16 %v479, %v477
        %v540 = vpack.c.b16 %v480, %v478
        %v541 = vpack.c.b16 %v483, %v481
        %v542 = vpack.c.b16 %v484, %v482
        %v543 = vpack.c.b16 %v487, %v485
        %v544 = vpack.c.b16 %v488, %v486
        %v545 = vpack.c.b16 %v491, %v489
        %v546 = vpack.c.b16 %v492, %v490
        %v547 = vpack.c.b16 %v495, %v493
        %v548 = vpack.c.b16 %v496, %v494
        %v549 = vpack.c.b16 %v499, %v497
        %v550 = vpack.c.b16 %v500, %v498
        %v551 = vpack.c.b16 %v503, %v501
        %v552 = vpack.c.b16 %v504, %v502
        %v553 = vpack.c.b16 %v507, %v505
        %v554 = vpack.c.b16 %v508, %v506
        %v555 = vpack.c.b16 %v511, %v509
        %v556 = vpack.c.b16 %v512, %v510
        %v557 = vpack.c.b16 %v515, %v513
        %v558 = vpack.c.b16 %v516, %v514
        %v559 = vpack.c.b16 %v519, %v517
        %v560 = vpack.c.b16 %v520, %v518
        %v561 = vpack.c.b16 %v523, %v521
        %v562 = vpack.c.b16 %v524, %v522
        %v563 = vpack.c.b16 %v527, %v525
        %v564 = vpack.c.b16 %v528, %v526
        %v565 = vpack.c.b16 %v531, %v529
        %v566 = vpack.c.b16 %v532, %v530
        %v567 = vpack.c.b16 %v535, %v533
        %v568 = vpack.c.b16 %v536, %v534
        %601 = vmatprep.subr.bf16.mxu0 %v538
        %602 = vmatpush1.bf16.msra.mxu0 %v537
        %603 = vmatprep.subr.bf16.mxu0 %v540
        %604 = vmatpush1.bf16.msra.mxu0 %v539
        %605 = vmatprep.subr.bf16.mxu0 %v542
        %606 = vmatpush1.bf16.msra.mxu0 %v541
        %607 = vmatprep.subr.bf16.mxu0 %v544
        %608 = vmatpush1.bf16.msra.mxu0 %v543
        %609 = vmatprep.subr.bf16.mxu0 %v546
        %610 = vmatpush1.bf16.msra.mxu0 %v545
        %611 = vmatprep.subr.bf16.mxu0 %v548
        %612 = vmatpush1.bf16.msra.mxu0 %v547
        %613 = vmatprep.subr.bf16.mxu0 %v550
        %614 = vmatpush1.bf16.msra.mxu0 %v549
        %615 = vmatprep.subr.bf16.mxu0 %v552
        %616 = vmatpush1.bf16.msra.mxu0 %v551
        %617 = vmatprep.subr.bf16.mxu0 %v554
        %618 = vmatpush1.bf16.msra.mxu0 %v553
        %619 = vmatprep.subr.bf16.mxu0 %v556
        %620 = vmatpush1.bf16.msra.mxu0 %v555
        %621 = vmatprep.subr.bf16.mxu0 %v558
        %622 = vmatpush1.bf16.msra.mxu0 %v557
        %623 = vmatprep.subr.bf16.mxu0 %v560
        %624 = vmatpush1.bf16.msra.mxu0 %v559
        %625 = vmatprep.subr.bf16.mxu0 %v562
        %626 = vmatpush1.bf16.msra.mxu0 %v561
        %627 = vmatprep.subr.bf16.mxu0 %v564
        %628 = vmatpush1.bf16.msra.mxu0 %v563
        %629 = vmatprep.subr.bf16.mxu0 %v566
        %630 = vmatpush1.bf16.msra.mxu0 %v565
        %631 = vmatprep.subr.bf16.mxu0 %v568
        %632 = vmatpush1.bf16.msra.mxu0 %v567
        %633 = vmatprep.mubr.bf16.mxu0 %v382
        %634 = vmatmul.mubr.bf16.gmra.mrb[0].mxu0 %v381
        %v635 = vpop.f32.mrb[0].mxu0
        %v636 = vadd.f32 %v434, %v635
        %v637 = vpop.f32.mrb[0].mxu0
        %v638 = vadd.f32 %v438, %v637
        %v639 = vpop.f32.mrb[0].mxu0
        %v640 = vadd.f32 %v434, %v639
        %v641 = vpop.f32.mrb[0].mxu0
        %v642 = vadd.f32 %v438, %v641
        %643 = vmatprep.mubr.bf16.mxu0 %v384
        %644 = vmatmul.mubr.bf16.gmra.mrb[0].mxu0 %v383
        %v645 = vpop.f32.mrb[0].mxu0
        %v646 = vadd.f32 %v434, %v645
        %v647 = vpop.f32.mrb[0].mxu0
        %v648 = vadd.f32 %v438, %v647
        %v649 = vpop.f32.mrb[0].mxu0
        %v650 = vadd.f32 %v434, %v649
        %v651 = vpop.f32.mrb[0].mxu0
        %v652 = vadd.f32 %v438, %v651
        %653 = vmatprep.mubr.bf16.mxu0 %v386
        %654 = vmatmul.mubr.bf16.gmra.mrb[0].mxu0 %v385
        %v655 = vpop.f32.mrb[0].mxu0
        %v656 = vadd.f32 %v434, %v655
        %v657 = vpop.f32.mrb[0].mxu0
        %v658 = vadd.f32 %v438, %v657
        %v659 = vpop.f32.mrb[0].mxu0
        %v660 = vadd.f32 %v434, %v659
        %v661 = vpop.f32.mrb[0].mxu0
        %v662 = vadd.f32 %v438, %v661
        %663 = vmatprep.mubr.bf16.mxu0 %v388
        %664 = vmatmul.mubr.bf16.gmra.mrb[0].mxu0 %v387
        %v665 = vpop.f32.mrb[0].mxu0
        %v666 = vadd.f32 %v434, %v665
        %v667 = vpop.f32.mrb[0].mxu0
        %v668 = vadd.f32 %v438, %v667
        %v669 = vpop.f32.mrb[0].mxu0
        %v670 = vadd.f32 %v434, %v669
        %v671 = vpop.f32.mrb[0].mxu0
        %v672 = vadd.f32 %v438, %v671
        %673 = vmatprep.mubr.bf16.mxu0 %v390
        %674 = vmatmul.mubr.bf16.gmra.mrb[0].mxu0 %v389
        %v675 = vpop.f32.mrb[0].mxu0
        %v676 = vadd.f32 %v434, %v675
        %v677 = vpop.f32.mrb[0].mxu0
        %v678 = vadd.f32 %v438, %v677
        %v679 = vpop.f32.mrb[0].mxu0
        %v680 = vadd.f32 %v434, %v679
        %v681 = vpop.f32.mrb[0].mxu0
        %v682 = vadd.f32 %v438, %v681
        %683 = vmatprep.mubr.bf16.mxu0 %v392
        %684 = vmatmul.mubr.bf16.gmra.mrb[0].mxu0 %v391
        %v685 = vpop.f32.mrb[0].mxu0
        %v686 = vadd.f32 %v434, %v685
        %v687 = vpop.f32.mrb[0].mxu0
        %v688 = vadd.f32 %v438, %v687
        %v689 = vpop.f32.mrb[0].mxu0
        %v690 = vadd.f32 %v434, %v689
        %v691 = vpop.f32.mrb[0].mxu0
        %v692 = vadd.f32 %v438, %v691
        %693 = vmatprep.mubr.bf16.mxu0 %v394
        %694 = vmatmul.mubr.bf16.gmra.mrb[0].mxu0 %v393
        %v695 = vpop.f32.mrb[0].mxu0
        %v696 = vadd.f32 %v434, %v695
        %v697 = vpop.f32.mrb[0].mxu0
        %v698 = vadd.f32 %v438, %v697
        %v699 = vpop.f32.mrb[0].mxu0
        %v700 = vadd.f32 %v434, %v699
        %v701 = vpop.f32.mrb[0].mxu0
        %v702 = vadd.f32 %v438, %v701
        %703 = vmatprep.mubr.bf16.mxu0 %v396
        %704 = vmatmul.mubr.bf16.gmra.mrb[0].mxu0 %v395
        %v705 = vpop.f32.mrb[0].mxu0
        %v706 = vadd.f32 %v434, %v705
        %v707 = vpop.f32.mrb[0].mxu0
        %v708 = vadd.f32 %v438, %v707
        %v709 = vpop.f32.mrb[0].mxu0
        %v710 = vadd.f32 %v434, %v709
        %v711 = vpop.f32.mrb[0].mxu0
        %v712 = vadd.f32 %v438, %v711
        %713 = vdwg.mxu0
        %v714 = vmax.f32 %v636, 0.0
        %v715 = vmax.f32 %v638, 0.0
        %v716 = vmax.f32 %v640, 0.0
        %v717 = vmax.f32 %v642, 0.0
        %v718 = vmax.f32 %v646, 0.0
        %v719 = vmax.f32 %v648, 0.0
        %v720 = vmax.f32 %v650, 0.0
        %v721 = vmax.f32 %v652, 0.0
        %v722 = vmax.f32 %v656, 0.0
        %v723 = vmax.f32 %v658, 0.0
        %v724 = vmax.f32 %v660, 0.0
        %v725 = vmax.f32 %v662, 0.0
        %v726 = vmax.f32 %v666, 0.0
        %v727 = vmax.f32 %v668, 0.0
        %v728 = vmax.f32 %v670, 0.0
        %v729 = vmax.f32 %v672, 0.0
        %v730 = vmax.f32 %v676, 0.0
        %v731 = vmax.f32 %v678, 0.0
        %v732 = vmax.f32 %v680, 0.0
        %v733 = vmax.f32 %v682, 0.0
        %v734 = vmax.f32 %v686, 0.0
        %v735 = vmax.f32 %v688, 0.0
        %v736 = vmax.f32 %v690, 0.0
        %v737 = vmax.f32 %v692, 0.0
        %v738 = vmax.f32 %v696, 0.0
        %v739 = vmax.f32 %v698, 0.0
        %v740 = vmax.f32 %v700, 0.0
        %v741 = vmax.f32 %v702, 0.0
        %v742 = vmax.f32 %v706, 0.0
        %v743 = vmax.f32 %v708, 0.0
        %v744 = vmax.f32 %v710, 0.0
        %v745 = vmax.f32 %v712, 0.0
        %v746 = vpack.c.bf16 %v716, %v714
        %v747 = vpack.c.bf16 %v717, %v715
        %v748 = vpack.c.bf16 %v720, %v718
        %v749 = vpack.c.bf16 %v721, %v719
        %v750 = vpack.c.bf16 %v724, %v722
        %v751 = vpack.c.bf16 %v725, %v723
        %v752 = vpack.c.bf16 %v728, %v726
        %v753 = vpack.c.bf16 %v729, %v727
        %v754 = vpack.c.bf16 %v732, %v730
        %v755 = vpack.c.bf16 %v733, %v731
        %v756 = vpack.c.bf16 %v736, %v734
        %v757 = vpack.c.bf16 %v737, %v735
        %v758 = vpack.c.bf16 %v740, %v738
        %v759 = vpack.c.bf16 %v741, %v739
        %v760 = vpack.c.bf16 %v744, %v742
        %v761 = vpack.c.bf16 %v745, %v743
        %v762 = vld [vmem:[#allocation7] sm:$0xff]
        %v763 = vld [vmem:[#allocation7 + $0x8] sm:$0xff]
        %v764 = vld [vmem:[#allocation7 + $0x10] sm:$0xff]
        %v765 = vld [vmem:[#allocation7 + $0x18] sm:$0xff]
        %v766 = vld [vmem:[#allocation7 + $0x20] sm:$0xff]
        %v767 = vld [vmem:[#allocation7 + $0x28] sm:$0xff]
        %v768 = vld [vmem:[#allocation7 + $0x30] sm:$0xff]
        %v769 = vld [vmem:[#allocation7 + $0x38] sm:$0xff]
        %v770 = vld [vmem:[#allocation7 + $0x40] sm:$0xff]
        %v771 = vld [vmem:[#allocation7 + $0x48] sm:$0xff]
        %v772 = vld [vmem:[#allocation7 + $0x50] sm:$0xff]
        %v773 = vld [vmem:[#allocation7 + $0x58] sm:$0xff]
        %v774 = vld [vmem:[#allocation7 + $0x60] sm:$0xff]
        %v775 = vld [vmem:[#allocation7 + $0x68] sm:$0xff]
        %v776 = vld [vmem:[#allocation7 + $0x70] sm:$0xff]
        %v777 = vld [vmem:[#allocation7 + $0x78] sm:$0xff]
        %v778 = vld [vmem:[#allocation7 + $0x80] sm:$0xff]
        %v779 = vld [vmem:[#allocation7 + $0x88] sm:$0xff]
        %v780 = vld [vmem:[#allocation7 + $0x90] sm:$0xff]
        %v781 = vld [vmem:[#allocation7 + $0x98] sm:$0xff]
        %v782 = vld [vmem:[#allocation7 + $0xa0] sm:$0xff]
        %v783 = vld [vmem:[#allocation7 + $0xa8] sm:$0xff]
        %v784 = vld [vmem:[#allocation7 + $0xb0] sm:$0xff]
        %v785 = vld [vmem:[#allocation7 + $0xb8] sm:$0xff]
        %v786 = vld [vmem:[#allocation7 + $0xc0] sm:$0xff]
        %v787 = vld [vmem:[#allocation7 + $0xc8] sm:$0xff]
        %v788 = vld [vmem:[#allocation7 + $0xd0] sm:$0xff]
        %v789 = vld [vmem:[#allocation7 + $0xd8] sm:$0xff]
        %v790 = vld [vmem:[#allocation7 + $0xe0] sm:$0xff]
        %v791 = vld [vmem:[#allocation7 + $0xe8] sm:$0xff]
        %v792 = vld [vmem:[#allocation7 + $0xf0] sm:$0xff]
        %v793 = vld [vmem:[#allocation7 + $0xf8] sm:$0xff]
        %v794 = vld [vmem:[%s4] sm:$0x3]
        %v796 = vlaneseq
        %v797 = vshrl.u32 %v796, 7
        %v798 = vsub.s32 0, %v797
        %v799 = vrot.slane %v794, %v798
        %v800 = vlaneseq
        %v801 = vshrl.u32 %v800, 7
        %v802 = vsub.s32 1, %v801
        %v803 = vrot.slane %v794, %v802
        %v838 = vunpack.c.l.b16 %v762
        %v839 = vunpack.c.h.b16 %v762
        %v840 = vunpack.c.l.b16 %v763
        %v841 = vunpack.c.h.b16 %v763
        %v842 = vunpack.c.l.b16 %v764
        %v843 = vunpack.c.h.b16 %v764
        %v844 = vunpack.c.l.b16 %v765
        %v845 = vunpack.c.h.b16 %v765
        %v846 = vunpack.c.l.b16 %v766
        %v847 = vunpack.c.h.b16 %v766
        %v848 = vunpack.c.l.b16 %v767
        %v849 = vunpack.c.h.b16 %v767
        %v850 = vunpack.c.l.b16 %v768
        %v851 = vunpack.c.h.b16 %v768
        %v852 = vunpack.c.l.b16 %v769
        %v853 = vunpack.c.h.b16 %v769
        %v854 = vunpack.c.l.b16 %v770
        %v855 = vunpack.c.h.b16 %v770
        %v856 = vunpack.c.l.b16 %v771
        %v857 = vunpack.c.h.b16 %v771
        %v858 = vunpack.c.l.b16 %v772
        %v859 = vunpack.c.h.b16 %v772
        %v860 = vunpack.c.l.b16 %v773
        %v861 = vunpack.c.h.b16 %v773
        %v862 = vunpack.c.l.b16 %v774
        %v863 = vunpack.c.h.b16 %v774
        %v864 = vunpack.c.l.b16 %v775
        %v865 = vunpack.c.h.b16 %v775
        %v866 = vunpack.c.l.b16 %v776
        %v867 = vunpack.c.h.b16 %v776
        %v868 = vunpack.c.l.b16 %v777
        %v869 = vunpack.c.h.b16 %v777
        %v870 = vunpack.c.l.b16 %v778
        %v871 = vunpack.c.h.b16 %v778
        %v872 = vunpack.c.l.b16 %v779
        %v873 = vunpack.c.h.b16 %v779
        %v874 = vunpack.c.l.b16 %v780
        %v875 = vunpack.c.h.b16 %v780
        %v876 = vunpack.c.l.b16 %v781
        %v877 = vunpack.c.h.b16 %v781
        %v878 = vunpack.c.l.b16 %v782
        %v879 = vunpack.c.h.b16 %v782
        %v880 = vunpack.c.l.b16 %v783
        %v881 = vunpack.c.h.b16 %v783
        %v882 = vunpack.c.l.b16 %v784
        %v883 = vunpack.c.h.b16 %v784
        %v884 = vunpack.c.l.b16 %v785
        %v885 = vunpack.c.h.b16 %v785
        %v886 = vunpack.c.l.b16 %v786
        %v887 = vunpack.c.h.b16 %v786
        %v888 = vunpack.c.l.b16 %v787
        %v889 = vunpack.c.h.b16 %v787
        %v890 = vunpack.c.l.b16 %v788
        %v891 = vunpack.c.h.b16 %v788
        %v892 = vunpack.c.l.b16 %v789
        %v893 = vunpack.c.h.b16 %v789
        %v894 = vunpack.c.l.b16 %v790
        %v895 = vunpack.c.h.b16 %v790
        %v896 = vunpack.c.l.b16 %v791
        %v897 = vunpack.c.h.b16 %v791
        %v898 = vunpack.c.l.b16 %v792
        %v899 = vunpack.c.h.b16 %v792
        %v900 = vunpack.c.l.b16 %v793
        %v901 = vunpack.c.h.b16 %v793
        %v902 = vpack.c.b16 %v840, %v838
        %v903 = vpack.c.b16 %v841, %v839
        %v904 = vpack.c.b16 %v844, %v842
        %v905 = vpack.c.b16 %v845, %v843
        %v906 = vpack.c.b16 %v848, %v846
        %v907 = vpack.c.b16 %v849, %v847
        %v908 = vpack.c.b16 %v852, %v850
        %v909 = vpack.c.b16 %v853, %v851
        %v910 = vpack.c.b16 %v856, %v854
        %v911 = vpack.c.b16 %v857, %v855
        %v912 = vpack.c.b16 %v860, %v858
        %v913 = vpack.c.b16 %v861, %v859
        %v914 = vpack.c.b16 %v864, %v862
        %v915 = vpack.c.b16 %v865, %v863
        %v916 = vpack.c.b16 %v868, %v866
        %v917 = vpack.c.b16 %v869, %v867
        %v918 = vpack.c.b16 %v872, %v870
        %v919 = vpack.c.b16 %v873, %v871
        %v920 = vpack.c.b16 %v876, %v874
        %v921 = vpack.c.b16 %v877, %v875
        %v922 = vpack.c.b16 %v880, %v878
        %v923 = vpack.c.b16 %v881, %v879
        %v924 = vpack.c.b16 %v884, %v882
        %v925 = vpack.c.b16 %v885, %v883
        %v926 = vpack.c.b16 %v888, %v886
        %v927 = vpack.c.b16 %v889, %v887
        %v928 = vpack.c.b16 %v892, %v890
        %v929 = vpack.c.b16 %v893, %v891
        %v930 = vpack.c.b16 %v896, %v894
        %v931 = vpack.c.b16 %v897, %v895
        %v932 = vpack.c.b16 %v900, %v898
        %v933 = vpack.c.b16 %v901, %v899
        %966 = vmatprep.subr.bf16.mxu0 %v903
        %967 = vmatpush1.bf16.msra.mxu0 %v902
        %968 = vmatprep.subr.bf16.mxu0 %v905
        %969 = vmatpush1.bf16.msra.mxu0 %v904
        %970 = vmatprep.subr.bf16.mxu0 %v907
        %971 = vmatpush1.bf16.msra.mxu0 %v906
        %972 = vmatprep.subr.bf16.mxu0 %v909
        %973 = vmatpush1.bf16.msra.mxu0 %v908
        %974 = vmatprep.subr.bf16.mxu0 %v911
        %975 = vmatpush1.bf16.msra.mxu0 %v910
        %976 = vmatprep.subr.bf16.mxu0 %v913
        %977 = vmatpush1.bf16.msra.mxu0 %v912
        %978 = vmatprep.subr.bf16.mxu0 %v915
        %979 = vmatpush1.bf16.msra.mxu0 %v914
        %980 = vmatprep.subr.bf16.mxu0 %v917
        %981 = vmatpush1.bf16.msra.mxu0 %v916
        %982 = vmatprep.subr.bf16.mxu0 %v919
        %983 = vmatpush1.bf16.msra.mxu0 %v918
        %984 = vmatprep.subr.bf16.mxu0 %v921
        %985 = vmatpush1.bf16.msra.mxu0 %v920
        %986 = vmatprep.subr.bf16.mxu0 %v923
        %987 = vmatpush1.bf16.msra.mxu0 %v922
        %988 = vmatprep.subr.bf16.mxu0 %v925
        %989 = vmatpush1.bf16.msra.mxu0 %v924
        %990 = vmatprep.subr.bf16.mxu0 %v927
        %991 = vmatpush1.bf16.msra.mxu0 %v926
        %992 = vmatprep.subr.bf16.mxu0 %v929
        %993 = vmatpush1.bf16.msra.mxu0 %v928
        %994 = vmatprep.subr.bf16.mxu0 %v931
        %995 = vmatpush1.bf16.msra.mxu0 %v930
        %996 = vmatprep.subr.bf16.mxu0 %v933
        %997 = vmatpush1.bf16.msra.mxu0 %v932
        %998 = vmatprep.mubr.bf16.mxu0 %v747
        %999 = vmatmul.mubr.bf16.gmra.mrb[0].mxu0 %v746
        %v1000 = vpop.f32.mrb[0].mxu0
        %v1001 = vadd.f32 %v799, %v1000
        %v1002 = vpop.f32.mrb[0].mxu0
        %v1003 = vadd.f32 %v803, %v1002
        %v1004 = vpop.f32.mrb[0].mxu0
        %v1005 = vadd.f32 %v799, %v1004
        %v1006 = vpop.f32.mrb[0].mxu0
        %v1007 = vadd.f32 %v803, %v1006
        %1008 = vmatprep.mubr.bf16.mxu0 %v749
        %1009 = vmatmul.mubr.bf16.gmra.mrb[0].mxu0 %v748
        %v1010 = vpop.f32.mrb[0].mxu0
        %v1011 = vadd.f32 %v799, %v1010
        %v1012 = vpop.f32.mrb[0].mxu0
        %v1013 = vadd.f32 %v803, %v1012
        %v1014 = vpop.f32.mrb[0].mxu0
        %v1015 = vadd.f32 %v799, %v1014
        %v1016 = vpop.f32.mrb[0].mxu0
        %v1017 = vadd.f32 %v803, %v1016
        %1018 = vmatprep.mubr.bf16.mxu0 %v751
        %1019 = vmatmul.mubr.bf16.gmra.mrb[0].mxu0 %v750
        %v1020 = vpop.f32.mrb[0].mxu0
        %v1021 = vadd.f32 %v799, %v1020
        %v1022 = vpop.f32.mrb[0].mxu0
        %v1023 = vadd.f32 %v803, %v1022
        %v1024 = vpop.f32.mrb[0].mxu0
        %v1025 = vadd.f32 %v799, %v1024
        %v1026 = vpop.f32.mrb[0].mxu0
        %v1027 = vadd.f32 %v803, %v1026
        %1028 = vmatprep.mubr.bf16.mxu0 %v753
        %1029 = vmatmul.mubr.bf16.gmra.mrb[0].mxu0 %v752
        %v1030 = vpop.f32.mrb[0].mxu0
        %v1031 = vadd.f32 %v799, %v1030
        %v1032 = vpop.f32.mrb[0].mxu0
        %v1033 = vadd.f32 %v803, %v1032
        %v1034 = vpop.f32.mrb[0].mxu0
        %v1035 = vadd.f32 %v799, %v1034
        %v1036 = vpop.f32.mrb[0].mxu0
        %v1037 = vadd.f32 %v803, %v1036
        %1038 = vmatprep.mubr.bf16.mxu0 %v755
        %1039 = vmatmul.mubr.bf16.gmra.mrb[0].mxu0 %v754
        %v1040 = vpop.f32.mrb[0].mxu0
        %v1041 = vadd.f32 %v799, %v1040
        %v1042 = vpop.f32.mrb[0].mxu0
        %v1043 = vadd.f32 %v803, %v1042
        %v1044 = vpop.f32.mrb[0].mxu0
        %v1045 = vadd.f32 %v799, %v1044
        %v1046 = vpop.f32.mrb[0].mxu0
        %v1047 = vadd.f32 %v803, %v1046
        %1048 = vmatprep.mubr.bf16.mxu0 %v757
        %1049 = vmatmul.mubr.bf16.gmra.mrb[0].mxu0 %v756
        %v1050 = vpop.f32.mrb[0].mxu0
        %v1051 = vadd.f32 %v799, %v1050
        %v1052 = vpop.f32.mrb[0].mxu0
        %v1053 = vadd.f32 %v803, %v1052
        %v1054 = vpop.f32.mrb[0].mxu0
        %v1055 = vadd.f32 %v799, %v1054
        %v1056 = vpop.f32.mrb[0].mxu0
        %v1057 = vadd.f32 %v803, %v1056
        %1058 = vmatprep.mubr.bf16.mxu0 %v759
        %1059 = vmatmul.mubr.bf16.gmra.mrb[0].mxu0 %v758
        %v1060 = vpop.f32.mrb[0].mxu0
        %v1061 = vadd.f32 %v799, %v1060
        %v1062 = vpop.f32.mrb[0].mxu0
        %v1063 = vadd.f32 %v803, %v1062
        %v1064 = vpop.f32.mrb[0].mxu0
        %v1065 = vadd.f32 %v799, %v1064
        %v1066 = vpop.f32.mrb[0].mxu0
        %v1067 = vadd.f32 %v803, %v1066
        %1068 = vmatprep.mubr.bf16.mxu0 %v761
        %1069 = vmatmul.mubr.bf16.gmra.mrb[0].mxu0 %v760
        %v1070 = vpop.f32.mrb[0].mxu0
        %v1071 = vadd.f32 %v799, %v1070
        %v1072 = vpop.f32.mrb[0].mxu0
        %v1073 = vadd.f32 %v803, %v1072
        %v1074 = vpop.f32.mrb[0].mxu0
        %v1075 = vadd.f32 %v799, %v1074
        %v1076 = vpop.f32.mrb[0].mxu0
        %v1077 = vadd.f32 %v803, %v1076
        %1078 = vdwg.mxu0
        %v1079 = vmax.f32 %v1001, 0.0
        %v1080 = vmax.f32 %v1003, 0.0
        %v1081 = vmax.f32 %v1005, 0.0
        %v1082 = vmax.f32 %v1007, 0.0
        %v1083 = vmax.f32 %v1011, 0.0
        %v1084 = vmax.f32 %v1013, 0.0
        %v1085 = vmax.f32 %v1015, 0.0
        %v1086 = vmax.f32 %v1017, 0.0
        %v1087 = vmax.f32 %v1021, 0.0
        %v1088 = vmax.f32 %v1023, 0.0
        %v1089 = vmax.f32 %v1025, 0.0
        %v1090 = vmax.f32 %v1027, 0.0
        %v1091 = vmax.f32 %v1031, 0.0
        %v1092 = vmax.f32 %v1033, 0.0
        %v1093 = vmax.f32 %v1035, 0.0
        %v1094 = vmax.f32 %v1037, 0.0
        %v1095 = vmax.f32 %v1041, 0.0
        %v1096 = vmax.f32 %v1043, 0.0
        %v1097 = vmax.f32 %v1045, 0.0
        %v1098 = vmax.f32 %v1047, 0.0
        %v1099 = vmax.f32 %v1051, 0.0
        %v1100 = vmax.f32 %v1053, 0.0
        %v1101 = vmax.f32 %v1055, 0.0
        %v1102 = vmax.f32 %v1057, 0.0
        %v1103 = vmax.f32 %v1061, 0.0
        %v1104 = vmax.f32 %v1063, 0.0
        %v1105 = vmax.f32 %v1065, 0.0
        %v1106 = vmax.f32 %v1067, 0.0
        %v1107 = vmax.f32 %v1071, 0.0
        %v1108 = vmax.f32 %v1073, 0.0
        %v1109 = vmax.f32 %v1075, 0.0
        %v1110 = vmax.f32 %v1077, 0.0
        %v1111 = vpack.c.bf16 %v1081, %v1079
        %v1112 = vpack.c.bf16 %v1082, %v1080
        %v1113 = vpack.c.bf16 %v1085, %v1083
        %v1114 = vpack.c.bf16 %v1086, %v1084
        %v1115 = vpack.c.bf16 %v1089, %v1087
        %v1116 = vpack.c.bf16 %v1090, %v1088
        %v1117 = vpack.c.bf16 %v1093, %v1091
        %v1118 = vpack.c.bf16 %v1094, %v1092
        %v1119 = vpack.c.bf16 %v1097, %v1095
        %v1120 = vpack.c.bf16 %v1098, %v1096
        %v1121 = vpack.c.bf16 %v1101, %v1099
        %v1122 = vpack.c.bf16 %v1102, %v1100
        %v1123 = vpack.c.bf16 %v1105, %v1103
        %v1124 = vpack.c.bf16 %v1106, %v1104
        %v1125 = vpack.c.bf16 %v1109, %v1107
        %v1126 = vpack.c.bf16 %v1110, %v1108
        %v1127 = vld [vmem:[#allocation8] sm:$0xf]
        %v1128 = vld [vmem:[#allocation8 + $0x4] sm:$0xf]
        %v1129 = vld [vmem:[#allocation8 + $0x8] sm:$0xf]
        %v1130 = vld [vmem:[#allocation8 + $0xc] sm:$0xf]
        %v1131 = vld [vmem:[#allocation8 + $0x10] sm:$0xf]
        %v1132 = vld [vmem:[#allocation8 + $0x14] sm:$0xf]
        %v1133 = vld [vmem:[#allocation8 + $0x18] sm:$0xf]
        %v1134 = vld [vmem:[#allocation8 + $0x1c] sm:$0xf]
        %v1135 = vld [vmem:[#allocation8 + $0x20] sm:$0xf]
        %v1136 = vld [vmem:[#allocation8 + $0x24] sm:$0xf]
        %v1137 = vld [vmem:[#allocation8 + $0x28] sm:$0xf]
        %v1138 = vld [vmem:[#allocation8 + $0x2c] sm:$0xf]
        %v1139 = vld [vmem:[#allocation8 + $0x30] sm:$0xf]
        %v1140 = vld [vmem:[#allocation8 + $0x34] sm:$0xf]
        %v1141 = vld [vmem:[#allocation8 + $0x38] sm:$0xf]
        %v1142 = vld [vmem:[#allocation8 + $0x3c] sm:$0xf]
        %v1143 = vld [vmem:[#allocation8 + $0x40] sm:$0xf]
        %v1144 = vld [vmem:[#allocation8 + $0x44] sm:$0xf]
        %v1145 = vld [vmem:[#allocation8 + $0x48] sm:$0xf]
        %v1146 = vld [vmem:[#allocation8 + $0x4c] sm:$0xf]
        %v1147 = vld [vmem:[#allocation8 + $0x50] sm:$0xf]
        %v1148 = vld [vmem:[#allocation8 + $0x54] sm:$0xf]
        %v1149 = vld [vmem:[#allocation8 + $0x58] sm:$0xf]
        %v1150 = vld [vmem:[#allocation8 + $0x5c] sm:$0xf]
        %v1151 = vld [vmem:[#allocation8 + $0x60] sm:$0xf]
        %v1152 = vld [vmem:[#allocation8 + $0x64] sm:$0xf]
        %v1153 = vld [vmem:[#allocation8 + $0x68] sm:$0xf]
        %v1154 = vld [vmem:[#allocation8 + $0x6c] sm:$0xf]
        %v1155 = vld [vmem:[#allocation8 + $0x70] sm:$0xf]
        %v1156 = vld [vmem:[#allocation8 + $0x74] sm:$0xf]
        %v1157 = vld [vmem:[#allocation8 + $0x78] sm:$0xf]
        %v1158 = vld [vmem:[#allocation8 + $0x7c] sm:$0xf]
        %v1191 = vunpack.c.l.b16 %v1127
        %v1192 = vunpack.c.l.b16 %v1128
        %v1193 = vunpack.c.l.b16 %v1129
        %v1194 = vunpack.c.l.b16 %v1130
        %v1195 = vunpack.c.l.b16 %v1131
        %v1196 = vunpack.c.l.b16 %v1132
        %v1197 = vunpack.c.l.b16 %v1133
        %v1198 = vunpack.c.l.b16 %v1134
        %v1199 = vunpack.c.l.b16 %v1135
        %v1200 = vunpack.c.l.b16 %v1136
        %v1201 = vunpack.c.l.b16 %v1137
        %v1202 = vunpack.c.l.b16 %v1138
        %v1203 = vunpack.c.l.b16 %v1139
        %v1204 = vunpack.c.l.b16 %v1140
        %v1205 = vunpack.c.l.b16 %v1141
        %v1206 = vunpack.c.l.b16 %v1142
        %v1207 = vunpack.c.l.b16 %v1143
        %v1208 = vunpack.c.l.b16 %v1144
        %v1209 = vunpack.c.l.b16 %v1145
        %v1210 = vunpack.c.l.b16 %v1146
        %v1211 = vunpack.c.l.b16 %v1147
        %v1212 = vunpack.c.l.b16 %v1148
        %v1213 = vunpack.c.l.b16 %v1149
        %v1214 = vunpack.c.l.b16 %v1150
        %v1215 = vunpack.c.l.b16 %v1151
        %v1216 = vunpack.c.l.b16 %v1152
        %v1217 = vunpack.c.l.b16 %v1153
        %v1218 = vunpack.c.l.b16 %v1154
        %v1219 = vunpack.c.l.b16 %v1155
        %v1220 = vunpack.c.l.b16 %v1156
        %v1221 = vunpack.c.l.b16 %v1157
        %v1222 = vunpack.c.l.b16 %v1158
        %v1223 = vpack.c.b16 %v1192, %v1191
        %v1224 = vpack.c.b16 %v1194, %v1193
        %v1225 = vpack.c.b16 %v1196, %v1195
        %v1226 = vpack.c.b16 %v1198, %v1197
        %v1227 = vpack.c.b16 %v1200, %v1199
        %v1228 = vpack.c.b16 %v1202, %v1201
        %v1229 = vpack.c.b16 %v1204, %v1203
        %v1230 = vpack.c.b16 %v1206, %v1205
        %v1231 = vpack.c.b16 %v1208, %v1207
        %v1232 = vpack.c.b16 %v1210, %v1209
        %v1233 = vpack.c.b16 %v1212, %v1211
        %v1234 = vpack.c.b16 %v1214, %v1213
        %v1235 = vpack.c.b16 %v1216, %v1215
        %v1236 = vpack.c.b16 %v1218, %v1217
        %v1237 = vpack.c.b16 %v1220, %v1219
        %v1238 = vpack.c.b16 %v1222, %v1221
        %1255 = vmatprep.subr.bf16.mxu0 0
        %1256 = vmatpush1.bf16.msra.mxu0 %v1223
        %1257 = vmatprep.subr.bf16.mxu0 0
        %1258 = vmatpush1.bf16.msra.mxu0 %v1224
        %1259 = vmatprep.subr.bf16.mxu0 0
        %1260 = vmatpush1.bf16.msra.mxu0 %v1225
        %1261 = vmatprep.subr.bf16.mxu0 0
        %1262 = vmatpush1.bf16.msra.mxu0 %v1226
        %1263 = vmatprep.subr.bf16.mxu0 0
        %1264 = vmatpush1.bf16.msra.mxu0 %v1227
        %1265 = vmatprep.subr.bf16.mxu0 0
        %1266 = vmatpush1.bf16.msra.mxu0 %v1228
        %1267 = vmatprep.subr.bf16.mxu0 0
        %1268 = vmatpush1.bf16.msra.mxu0 %v1229
        %1269 = vmatprep.subr.bf16.mxu0 0
        %1270 = vmatpush1.bf16.msra.mxu0 %v1230
        %1271 = vmatprep.subr.bf16.mxu0 0
        %1272 = vmatpush1.bf16.msra.mxu0 %v1231
        %1273 = vmatprep.subr.bf16.mxu0 0
        %1274 = vmatpush1.bf16.msra.mxu0 %v1232
        %1275 = vmatprep.subr.bf16.mxu0 0
        %1276 = vmatpush1.bf16.msra.mxu0 %v1233
        %1277 = vmatprep.subr.bf16.mxu0 0
        %1278 = vmatpush1.bf16.msra.mxu0 %v1234
        %1279 = vmatprep.subr.bf16.mxu0 0
        %1280 = vmatpush1.bf16.msra.mxu0 %v1235
        %1281 = vmatprep.subr.bf16.mxu0 0
        %1282 = vmatpush1.bf16.msra.mxu0 %v1236
        %1283 = vmatprep.subr.bf16.mxu0 0
        %1284 = vmatpush1.bf16.msra.mxu0 %v1237
        %1285 = vmatprep.subr.bf16.mxu0 0
        %1286 = vmatpush1.bf16.msra.mxu0 %v1238
        %1287 = vmatprep.mubr.bf16.mxu0 %v1112
        %1288 = vmatmul.mubr.bf16.gmra.mrb[0].mxu0 %v1111
        %v1289 = vpop.f32.mrb[0].mxu0
        %v1290 = vadd.f32 0.0, %v1289
        %v1291 = vpop.f32.mrb[0].mxu0
        %v1292 = vpop.f32.mrb[0].mxu0
        %v1293 = vadd.f32 0.0, %v1292
        %v1294 = vpop.f32.mrb[0].mxu0
        %1295 = vmatprep.mubr.bf16.mxu0 %v1114
        %1296 = vmatmul.mubr.bf16.gmra.mrb[0].mxu0 %v1113
        %v1297 = vpop.f32.mrb[0].mxu0
        %v1298 = vadd.f32 0.0, %v1297
        %v1299 = vpop.f32.mrb[0].mxu0
        %v1300 = vpop.f32.mrb[0].mxu0
        %v1301 = vadd.f32 0.0, %v1300
        %v1302 = vpop.f32.mrb[0].mxu0
        %1303 = vmatprep.mubr.bf16.mxu0 %v1116
        %1304 = vmatmul.mubr.bf16.gmra.mrb[0].mxu0 %v1115
        %v1305 = vpop.f32.mrb[0].mxu0
        %v1306 = vadd.f32 0.0, %v1305
        %v1307 = vpop.f32.mrb[0].mxu0
        %v1308 = vpop.f32.mrb[0].mxu0
        %v1309 = vadd.f32 0.0, %v1308
        %v1310 = vpop.f32.mrb[0].mxu0
        %1311 = vmatprep.mubr.bf16.mxu0 %v1118
        %1312 = vmatmul.mubr.bf16.gmra.mrb[0].mxu0 %v1117
        %v1313 = vpop.f32.mrb[0].mxu0
        %v1314 = vadd.f32 0.0, %v1313
        %v1315 = vpop.f32.mrb[0].mxu0
        %v1316 = vpop.f32.mrb[0].mxu0
        %v1317 = vadd.f32 0.0, %v1316
        %v1318 = vpop.f32.mrb[0].mxu0
        %1319 = vmatprep.mubr.bf16.mxu0 %v1120
        %1320 = vmatmul.mubr.bf16.gmra.mrb[0].mxu0 %v1119
        %v1321 = vpop.f32.mrb[0].mxu0
        %v1322 = vadd.f32 0.0, %v1321
        %v1323 = vpop.f32.mrb[0].mxu0
        %v1324 = vpop.f32.mrb[0].mxu0
        %v1325 = vadd.f32 0.0, %v1324
        %v1326 = vpop.f32.mrb[0].mxu0
        %1327 = vmatprep.mubr.bf16.mxu0 %v1122
        %1328 = vmatmul.mubr.bf16.gmra.mrb[0].mxu0 %v1121
        %v1329 = vpop.f32.mrb[0].mxu0
        %v1330 = vadd.f32 0.0, %v1329
        %v1331 = vpop.f32.mrb[0].mxu0
        %v1332 = vpop.f32.mrb[0].mxu0
        %v1333 = vadd.f32 0.0, %v1332
        %v1334 = vpop.f32.mrb[0].mxu0
        %1335 = vmatprep.mubr.bf16.mxu0 %v1124
        %1336 = vmatmul.mubr.bf16.gmra.mrb[0].mxu0 %v1123
        %v1337 = vpop.f32.mrb[0].mxu0
        %v1338 = vadd.f32 0.0, %v1337
        %v1339 = vpop.f32.mrb[0].mxu0
        %v1340 = vpop.f32.mrb[0].mxu0
        %v1341 = vadd.f32 0.0, %v1340
        %v1342 = vpop.f32.mrb[0].mxu0
        %1343 = vmatprep.mubr.bf16.mxu0 %v1126
        %1344 = vmatmul.mubr.bf16.gmra.mrb[0].mxu0 %v1125
        %v1345 = vpop.f32.mrb[0].mxu0
        %v1346 = vadd.f32 0.0, %v1345
        %v1347 = vpop.f32.mrb[0].mxu0
        %v1348 = vpop.f32.mrb[0].mxu0
        %v1349 = vadd.f32 0.0, %v1348
        %v1350 = vpop.f32.mrb[0].mxu0
        %1351 = vdwg.mxu0
        %v1352 = vld [vmem:[#allocation2] sm:$0x1]
        %v1354 = vlaneseq
        %v1355 = vshrl.u32 %v1354, 7
        %v1356 = vsub.s32 0, %v1355
        %v1357 = vrot.slane %v1352, %v1356
        %v1359 = vadd.f32 %v1290, %v1357
        %v1360 = vadd.f32 %v1293, %v1357
        %v1361 = vadd.f32 %v1298, %v1357
        %v1362 = vadd.f32 %v1301, %v1357
        %v1363 = vadd.f32 %v1306, %v1357
        %v1364 = vadd.f32 %v1309, %v1357
        %v1365 = vadd.f32 %v1314, %v1357
        %v1366 = vadd.f32 %v1317, %v1357
        %v1367 = vadd.f32 %v1322, %v1357
        %v1368 = vadd.f32 %v1325, %v1357
        %v1369 = vadd.f32 %v1330, %v1357
        %v1370 = vadd.f32 %v1333, %v1357
        %v1371 = vadd.f32 %v1338, %v1357
        %v1372 = vadd.f32 %v1341, %v1357
        %v1373 = vadd.f32 %v1346, %v1357
        %v1374 = vadd.f32 %v1349, %v1357
        %vm1375 = vcmask 7168
        %1376 = vst.msk [vmem:[%s346] sm:$0xff] %vm1375, %v1359
        %1377 = vst.msk [vmem:[%s346 + $0x8] sm:$0xff] %vm1375, %v1360
        %1378 = vst.msk [vmem:[%s346 + $0x10] sm:$0xff] %vm1375, %v1361
        %1379 = vst.msk [vmem:[%s346 + $0x18] sm:$0xff] %vm1375, %v1362
        %1380 = vst.msk [vmem:[%s346 + $0x20] sm:$0xff] %vm1375, %v1363
        %1381 = vst.msk [vmem:[%s346 + $0x28] sm:$0xff] %vm1375, %v1364
        %1382 = vst.msk [vmem:[%s346 + $0x30] sm:$0xff] %vm1375, %v1365
        %1383 = vst.msk [vmem:[%s346 + $0x38] sm:$0xff] %vm1375, %v1366
        %1384 = vst.msk [vmem:[%s346 + $0x40] sm:$0xff] %vm1375, %v1367
        %1385 = vst.msk [vmem:[%s346 + $0x48] sm:$0xff] %vm1375, %v1368
        %1386 = vst.msk [vmem:[%s346 + $0x50] sm:$0xff] %vm1375, %v1369
        %1387 = vst.msk [vmem:[%s346 + $0x58] sm:$0xff] %vm1375, %v1370
        %1388 = vst.msk [vmem:[%s346 + $0x60] sm:$0xff] %vm1375, %v1371
        %1389 = vst.msk [vmem:[%s346 + $0x68] sm:$0xff] %vm1375, %v1372
        %1390 = vst.msk [vmem:[%s346 + $0x70] sm:$0xff] %vm1375, %v1373
        %1391 = vst.msk [vmem:[%s346 + $0x78] sm:$0xff] %vm1375, %v1374
        %s1392 = smul.u32 16, %s25
        %p1393 = scmp.lt.s32.totalorder %s1392, 31
        %s1394 = scalar_select %p1393, %s1392, 31
        %s1395 = smul.addr %s1394, 8
        %s1396 = scalar_lea.vmem %s7, %s1395
        // Predicated region
        $region65: #{regression_model_forward.1} parent=47 // pred_check
          %p1397 = pneg %p195
        $region66: #{regression_model_forward.1} parent=47 // pred_check_branch
          %1399 = sbr.rel (%p1397) target = $region68
        $region67: #{regression_model_forward.1} parent=47 // pred_region
          %s1400 = smul.u32 16, %s25
        $region68: #{regression_model_forward.1} parent=47 // pred_fallthru
          _
      $region48: #{regression_model_forward.1} parent=5 // pred_fallthru
        _
      %p1401 = scmp.le.s32.totalorder 2, %s20
      // Predicated region
      $region69: #{regression_model_forward.1} parent=5 // pred_check
        %p1402 = pneg %p1401
      $region70: #{regression_model_forward.1} parent=5 // pred_check_branch
        %1404 = sbr.rel (%p1402) target = $region72
      $region71: #{regression_model_forward.1} parent=5 // pred_region
        %s1405 = ssub.s32 %s20, 2
        // Predicated region
        $region73: #{regression_model_forward.1} parent=71 // pred_check
          %p1406 = pneg %p201
        $region74: #{regression_model_forward.1} parent=71 // pred_check_branch
          %1408 = sbr.rel (%p1406) target = $region76
        $region75: #{regression_model_forward.1} parent=71 // pred_region
          %s1409 = smul.u32 16, %s26
          %p1410 = scmp.lt.s32.totalorder %s1409, 31
          %s1411 = scalar_select %p1410, %s1409, 31
          %s1412 = smul.addr %s1411, 8
          %s1413 = scalar_lea.vmem %s7, %s1412
        $region76: #{regression_model_forward.1} parent=71 // pred_fallthru
          _
      $region72: #{regression_model_forward.1} parent=5 // pred_fallthru
        _
    $region6: #{regression_model_forward.1} parent=1 // loop_footer
      %s24 = sadd.s32 1, %s20
    $region7: #{regression_model_forward.1} parent=1 // loop_footer_branch
      %19 = sbr.rel target = $region3
    $region8: #{regression_model_forward.1} parent=1 // loop_exit
      _
    %1414 = vsyncpa [#allocation4], 1
    %s1415 = scalar_lea.sflag [#allocation4], 1
    %1416 = vsyncpa %s1415, 1
    %1417 = vsyncpa [#allocation6], 1
    %1418 = vsyncpa [#allocation9], 1

</llo_original>
